<compile_context>
chip_gen: v7x
topology: tpu7x:2x2x1
jax: 0.10.0
libtpu: 0.0.40
codegen_flags: <defaults>
</compile_context>

<pallas_src>
import functools
import math
import numpy as np
import jax
import jax.numpy as jnp
from jax.experimental import pallas as pl
from jax.experimental.pallas import tpu as pltpu

_T_PAD = 128                                      # 13 + 32 + 7 + 24 = 76 -> padded to 128 rows
_TABLE_ORDER = ("month", "day", "weekday", "hour")  # matches x_mark columns 0..3


# ----------------------------- kernel helpers -------------------------------
def _token_embedding(x, wcat):
    """Circular Conv1d(c_in->d_model, k=3, pad=1, no bias) as ONE tall MXU matmul.

    x    : (Bt, L, c_in)       value block
    wcat : (3*c_in, d_model)   row-stacked taps [w0.T ; w1.T ; w2.T]
    returns (Bt*L, d_model) float32
    """
    Bt, L, c_in = x.shape
    # Circular +/-1 neighbours along L, per batch element. Done on the c_in-wide input
    # (cheap sublane concats) instead of the d_model-wide product.
    x_prev = jnp.concatenate([x[:, L - 1:, :], x[:, :L - 1, :]], axis=1)   # x[(l-1) % L]
    x_next = jnp.concatenate([x[:, 1:, :], x[:, :1, :]], axis=1)           # x[(l+1) % L]
    xcat = jnp.concatenate([x_prev, x, x_next], axis=2)                    # (Bt, L, 3*c_in)
    xf = xcat.reshape(Bt * L, 3 * c_in)                                    # tall M for the MXU
    return jnp.dot(xf, wcat, preferred_element_type=jnp.float32)


def _embed_kernel(x_ref, mark_ref, wcat_ref, table_ref, pe_ref, o_ref,
                  *, col_offsets, col_sizes):
    # Block shapes:
    #   x_ref    : (Bt, L, c_in)        Bt batch elements per grid step
    #   mark_ref : (Bt, L, 4) int32     raw calendar indices (offsets applied in-kernel)
    #   wcat_ref : (3*c_in, d_model)    fused conv taps             (resident)
    #   table_ref: (_T_PAD, d_model)    concatenated temporal table (resident)
    #   pe_ref   : (L, d_model)         positional rows pe[:L]      (resident)
    #   o_ref    : (Bt, L, d_model)
    Bt, L, _ = x_ref.shape
    d_model = pe_ref.shape[1]
    rows = Bt * L

    # --- token embedding: single MXU matmul ---
    acc = _token_embedding(x_ref[...], wcat_ref[...])                      # (rows, d_model) f32

    # --- temporal embedding: one-hot(4 calendar features) @ fixed table, on the MXU ---
    table = table_ref[...]                                                 # (_T_PAD, d_model)
    idx = mark_ref[...].reshape(rows, 4)                                   # int32
    iota_t = jax.lax.broadcasted_iota(jnp.int32, (rows, table.shape[0]), 1)

    def onehot_col(j):
        # clamp guards out-of-range x_mark values; offsets are compile-time constants
        col = jnp.clip(idx[:, j:j + 1], 0, col_sizes[j] - 1) + col_offsets[j]
        return (col == iota_t).astype(jnp.int32)

    oh = onehot_col(0) + onehot_col(1) + onehot_col(2) + onehot_col(3)     # int32 adds
    acc = acc + jnp.dot(oh.astype(table.dtype), table,
                        preferred_element_type=jnp.float32)

    # --- positional rows + store (dropout is identity in eval) ---
    out = acc.reshape(Bt, L, d_model) + pe_ref[...].astype(jnp.float32)[None, :, :]
    o_ref[...] = out.astype(o_ref.dtype)


def _embed_kernel_nomark(x_ref, wcat_ref, pe_ref, o_ref):
    Bt, L, _ = x_ref.shape
    d_model = pe_ref.shape[1]
    acc = _token_embedding(x_ref[...], wcat_ref[...])
    out = acc.reshape(Bt, L, d_model) + pe_ref[...].astype(jnp.float32)[None, :, :]
    o_ref[...] = out.astype(o_ref.dtype)


# ------------------------- one-time parameter packing -----------------------
def pack_data_embedding_params(conv_weight, temporal_tables, pe_table,
                               *, compute_dtype=jnp.float32):
    """Pack module parameters ONCE (do not rebuild per forward call).

    conv_weight     : [d_model, c_in, 3] PyTorch Conv1d layout (circular padding).
    temporal_tables : dict of fixed sinusoidal tables ('month','day','weekday','hour').
    pe_table        : [max_len, d_model] positional sinusoid table.
    """
    # Row-stacked conv taps: (3*c_in, d_model) = [w0.T ; w1.T ; w2.T].
    wcat = jnp.concatenate(
        [jnp.transpose(conv_weight[:, :, k]) for k in range(3)], axis=0
    ).astype(compute_dtype)

    sizes = tuple(int(temporal_tables[n].shape[0]) for n in _TABLE_ORDER)
    assert sum(sizes) <= _T_PAD
    offsets = tuple(int(v) for v in np.concatenate([[0], np.cumsum(sizes)[:-1]]))
    table = jnp.concatenate([temporal_tables[n] for n in _TABLE_ORDER], axis=0)
    table = jnp.pad(table, ((0, _T_PAD - table.shape[0]), (0, 0))).astype(compute_dtype)

    return {"wcat": wcat, "table": table, "pe": pe_table.astype(compute_dtype),
            "offsets": offsets, "sizes": sizes}


# --------------------------------- wrapper -----------------------------------
def _pick_batch_tile(B, L, target_rows=512):
    """Batch elements per grid step: Bt*L ~ target_rows (amortizes the ~0.35us per-step
    overhead, gives the MXU a tall M); Bt divides B so there are no partial blocks."""
    bt = max(1, min(B, max(1, target_rows // max(L, 1))))
    while B % bt:
        bt -= 1
    return bt


def data_embedding(x, x_mark, packed, *, compute_dtype=jnp.float32,
                   out_dtype=jnp.float32, target_rows=512):
    """x: [B, L, c_in]; x_mark: [B, L, >=4] int (month, day, weekday, hour) or None.
    `packed` comes from pack_data_embedding_params().  Returns [B, L, d_model]."""
    B, L, c_in = x.shape
    wcat, table, pe_full = packed["wcat"], packed["table"], packed["pe"]
    d_model = wcat.shape[1]
    assert pe_full.shape[0] >= L

    bt = _pick_batch_tile(B, L, target_rows)
    grid = (B // bt,)

    # Positional rows: DMA the first L rows straight out of the full table when the
    # (L, d_model) block is (8,128)-aligned; otherwise slice once here.
    pe_arg = pe_full if (L % 8 == 0 and d_model % 128 == 0) else pe_full[:L]
    pe_spec = pl.BlockSpec((L, d_model), lambda b: (0, 0))

    x_spec = pl.BlockSpec((bt, L, c_in), lambda b: (b, 0, 0))
    wcat_spec = pl.BlockSpec(wcat.shape, lambda b: (0, 0))
    out_spec = pl.BlockSpec((bt, L, d_model), lambda b: (b, 0, 0))

    if x_mark is None:
        kernel = _embed_kernel_nomark
        in_specs = [x_spec, wcat_spec, pe_spec]
        args = (x.astype(compute_dtype), wcat, pe_arg)
    else:
        kernel = functools.partial(_embed_kernel, col_offsets=packed["offsets"],
                                   col_sizes=packed["sizes"])
        mark = x_mark[..., :4].astype(jnp.int32)
        mark_spec = pl.BlockSpec((bt, L, 4), lambda b: (b, 0, 0))
        table_spec = pl.BlockSpec(table.shape, lambda b: (0, 0))
        in_specs = [x_spec, mark_spec, wcat_spec, table_spec, pe_spec]
        args = (x.astype(compute_dtype), mark, wcat, table, pe_arg)

    # TODO(synk): for very long L, additionally tile L with a 1-row circular halo (the
    # in-block +/-1 neighbour trick is only valid with the full sequence in one block)
    # and set vmem_limit_bytes so each tile fits v7x's 64 MiB VMEM with >=2 parallel tiles.
    return pl.pallas_call(
        kernel,
        out_shape=jax.ShapeDtypeStruct((B, L, d_model), out_dtype),
        grid_spec=pltpu.PrefetchScalarGridSpec(
            num_scalar_prefetch=0,
            grid=grid,
            in_specs=in_specs,
            out_specs=out_spec,
        ),
        compiler_params=pltpu.CompilerParams(dimension_semantics=("parallel",)),
    )(*args)


# ------------------------- parameter construction ---------------------------
def fixed_embedding_table(c_in, d_model):
    """Sinusoidal table matching FixedEmbedding / PositionalEmbedding (d_model even)."""
    w = np.zeros((c_in, d_model), dtype=np.float32)
    position = np.arange(0, c_in, dtype=np.float32)[:, None]
    div_term = np.exp(np.arange(0, d_model, 2, dtype=np.float32)
                      * -(math.log(10000.0) / d_model))
    w[:, 0::2] = np.sin(position * div_term)
    w[:, 1::2] = np.cos(position * div_term)
    return jnp.asarray(w)


def make_params(key, c_in, d_model, max_len=64):
    # Conv1d weight [d_model, c_in, 3], kaiming_normal(fan_in, leaky_relu)-style init.
    fan_in = c_in * 3
    gain = math.sqrt(2.0 / (1.0 + 0.01 ** 2))
    std = gain / math.sqrt(fan_in)
    conv_weight = std * jax.random.normal(key, (d_model, c_in, 3), dtype=jnp.float32)

    temporal_tables = {
        "hour": fixed_embedding_table(24, d_model),
        "weekday": fixed_embedding_table(7, d_model),
        "day": fixed_embedding_table(32, d_model),
        "month": fixed_embedding_table(13, d_model),
    }
    pe_table = fixed_embedding_table(max_len, d_model)   # PositionalEmbedding rows
    # TODO(synk): dropout(p=0.1) is identity in eval mode; training-mode RNG dropout not implemented.
    return conv_weight, temporal_tables, pe_table


# ------------------------------ reference -----------------------------------
def reference(x, x_mark, conv_weight, temporal_tables, pe_table):
    """Pure-JAX reference: circular conv + fixed temporal lookups + positional rows."""
    B, L, c_in = x.shape
    x_ncw = jnp.transpose(x, (0, 2, 1))                      # [B, c_in, L]
    x_pad = jnp.concatenate([x_ncw[:, :, -1:], x_ncw, x_ncw[:, :, :1]], axis=2)
    conv = jax.lax.conv_general_dilated(
        x_pad, conv_weight, window_strides=(1,), padding="VALID",
        dimension_numbers=("NCH", "OIH", "NCH"))             # [B, d_model, L]
    val = jnp.transpose(conv, (0, 2, 1))                     # [B, L, d_model]
    month_x = jnp.take(temporal_tables["month"], x_mark[:, :, 0], axis=0)
    day_x = jnp.take(temporal_tables["day"], x_mark[:, :, 1], axis=0)
    weekday_x = jnp.take(temporal_tables["weekday"], x_mark[:, :, 2], axis=0)
    hour_x = jnp.take(temporal_tables["hour"], x_mark[:, :, 3], axis=0)
    pos = pe_table[:L][None, :, :]
    return val + hour_x + weekday_x + day_x + month_x + pos


# --------------------------------- main --------------------------------------
if __name__ == "__main__":
    B, L, c_in, d_model = 2, 16, 4, 128   # d_model=128 keeps the output lane-dense

    key = jax.random.PRNGKey(0)
    k_w, k_x, k_m = jax.random.split(key, 3)

    conv_weight, temporal_tables, pe_table = make_params(k_w, c_in, d_model, max_len=64)
    packed = pack_data_embedding_params(conv_weight, temporal_tables, pe_table)  # pack ONCE

    x = jax.random.normal(k_x, (B, L, c_in), dtype=jnp.float32)
    # x_mark columns: [month(0..12), day(0..31), weekday(0..6), hour(0..23)]
    km0, km1, km2, km3 = jax.random.split(k_m, 4)
    x_mark = jnp.stack(
        [
            jax.random.randint(km0, (B, L), 0, 13),
            jax.random.randint(km1, (B, L), 0, 32),
            jax.random.randint(km2, (B, L), 0, 7),
            jax.random.randint(km3, (B, L), 0, 24),
        ],
        axis=-1,
    ).astype(jnp.int32)

    # Steady-state path: packed params closed over, wrapper jitted.
    embed = jax.jit(lambda xv, xm: data_embedding(xv, xm, packed))
    out = jax.block_until_ready(embed(x, x_mark))

    ref = jax.block_until_ready(reference(x, x_mark, conv_weight, temporal_tables, pe_table))
    assert out.shape == (B, L, d_model)
    np.testing.assert_allclose(np.asarray(out), np.asarray(ref), rtol=1e-5, atol=1e-5)

    print("KERNEL_OK")
</pallas_src>

<mosaic_0001>
module attributes {stable_mosaic.version = 11 : i64} {
  func.func @_embed_kernel(%arg0: i32, %arg1: memref<2x16x4xf32, #tpu.memory_space<vmem>>, %arg2: memref<2x16x4xi32, #tpu.memory_space<vmem>>, %arg3: memref<12x128xf32, #tpu.memory_space<vmem>>, %arg4: memref<128x128xf32, #tpu.memory_space<vmem>>, %arg5: memref<16x128xf32, #tpu.memory_space<vmem>>, %arg6: memref<2x16x128xf32, #tpu.memory_space<vmem>>) attributes {dimension_semantics = [#tpu.dimension_semantics<parallel>], iteration_bounds = array<i64: 1>, scalar_prefetch = 0 : i64, scratch_operands = 0 : i64, tpu.core_type = #tpu.core_type<tc>, window_params = [{transform_indices = @transform_0, window_bounds = array<i64: 2, 16, 4>}, {transform_indices = @transform_1, window_bounds = array<i64: 2, 16, 4>}, {pipeline_mode = #tpu.pipeline_mode<synchronous>, transform_indices = @transform_2, window_bounds = array<i64: 12, 128>}, {pipeline_mode = #tpu.pipeline_mode<synchronous>, transform_indices = @transform_3, window_bounds = array<i64: 128, 128>}, {transform_indices = @transform_4, window_bounds = array<i64: 16, 128>}, {transform_indices = @transform_5, window_bounds = array<i64: 2, 16, 128>}]} {
    %c0 = arith.constant 0 : index
    %c0_0 = arith.constant 0 : index
    %c0_1 = arith.constant 0 : index
    %0 = vector.load %arg1[%c0, %c0_0, %c0_1] : memref<2x16x4xf32, #tpu.memory_space<vmem>>, vector<2x16x4xf32>
    %c0_2 = arith.constant 0 : index
    %c0_3 = arith.constant 0 : index
    %1 = vector.load %arg3[%c0_2, %c0_3] : memref<12x128xf32, #tpu.memory_space<vmem>>, vector<12x128xf32>
    %2 = vector.extract_strided_slice %0 {offsets = [0, 15, 0], sizes = [2, 1, 4], strides = [1, 1, 1]} : vector<2x16x4xf32> to vector<2x1x4xf32>
    %3 = vector.extract_strided_slice %0 {offsets = [0, 0, 0], sizes = [2, 15, 4], strides = [1, 1, 1]} : vector<2x16x4xf32> to vector<2x15x4xf32>
    %4 = tpu.concatenate %2, %3 in 1 : vector<2x1x4xf32>, vector<2x15x4xf32> -> vector<2x16x4xf32>
    %5 = vector.extract_strided_slice %0 {offsets = [0, 1, 0], sizes = [2, 15, 4], strides = [1, 1, 1]} : vector<2x16x4xf32> to vector<2x15x4xf32>
    %6 = vector.extract_strided_slice %0 {offsets = [0, 0, 0], sizes = [2, 1, 4], strides = [1, 1, 1]} : vector<2x16x4xf32> to vector<2x1x4xf32>
    %7 = tpu.concatenate %5, %6 in 1 : vector<2x15x4xf32>, vector<2x1x4xf32> -> vector<2x16x4xf32>
    %8 = tpu.concatenate %4, %0, %7 in 2 : vector<2x16x4xf32>, vector<2x16x4xf32>, vector<2x16x4xf32> -> vector<2x16x12xf32>
    %9 = vector.shape_cast %8 : vector<2x16x12xf32> to vector<32x12xf32>
    %cst = arith.constant dense<0.000000e+00> : vector<32x128xf32>
    %10 = tpu.matmul %9, %1, %cst {dimension_numbers = #tpu.dot_dimension_numbers<[1], [0], [0], [1], [0, 0, 1, 1], [], []>} : vector<32x12xf32>, vector<12x128xf32>, vector<32x128xf32> -> vector<32x128xf32>
    %c0_4 = arith.constant 0 : index
    %c0_5 = arith.constant 0 : index
    %11 = vector.load %arg4[%c0_4, %c0_5] : memref<128x128xf32, #tpu.memory_space<vmem>>, vector<128x128xf32>
    %c0_6 = arith.constant 0 : index
    %c0_7 = arith.constant 0 : index
    %c0_8 = arith.constant 0 : index
    %12 = vector.load %arg2[%c0_6, %c0_7, %c0_8] : memref<2x16x4xi32, #tpu.memory_space<vmem>>, vector<2x16x4xi32>
    %13 = vector.shape_cast %12 : vector<2x16x4xi32> to vector<32x4xi32>
    %14 = tpu.iota {dimensions = array<i32: 1>} : vector<32x128xi32>
    %15 = vector.extract_strided_slice %13 {offsets = [0, 0], sizes = [32, 1], strides = [1, 1]} : vector<32x4xi32> to vector<32x1xi32>
    %c0_i32 = arith.constant 0 : i32
    %c12_i32 = arith.constant 12 : i32
    %16 = vector.broadcast %c0_i32 : i32 to vector<32x1xi32>
    %17 = arith.maxsi %16, %15 : vector<32x1xi32>
    %18 = vector.broadcast %c12_i32 : i32 to vector<32x1xi32>
    %19 = arith.minsi %18, %17 : vector<32x1xi32>
    %c0_i32_9 = arith.constant 0 : i32
    %20 = vector.broadcast %c0_i32_9 : i32 to vector<32x1xi32>
    %21 = arith.addi %19, %20 : vector<32x1xi32>
    %22 = vector.broadcast %21 : vector<32x1xi32> to vector<32x128xi32>
    %23 = arith.cmpi eq, %22, %14 : vector<32x128xi32>
    %24 = arith.extui %23 : vector<32x128xi1> to vector<32x128xi32>
    %25 = vector.extract_strided_slice %13 {offsets = [0, 1], sizes = [32, 1], strides = [1, 1]} : vector<32x4xi32> to vector<32x1xi32>
    %c0_i32_10 = arith.constant 0 : i32
    %c31_i32 = arith.constant 31 : i32
    %26 = vector.broadcast %c0_i32_10 : i32 to vector<32x1xi32>
    %27 = arith.maxsi %26, %25 : vector<32x1xi32>
    %28 = vector.broadcast %c31_i32 : i32 to vector<32x1xi32>
    %29 = arith.minsi %28, %27 : vector<32x1xi32>
    %c13_i32 = arith.constant 13 : i32
    %30 = vector.broadcast %c13_i32 : i32 to vector<32x1xi32>
    %31 = arith.addi %29, %30 : vector<32x1xi32>
    %32 = vector.broadcast %31 : vector<32x1xi32> to vector<32x128xi32>
    %33 = arith.cmpi eq, %32, %14 : vector<32x128xi32>
    %34 = arith.extui %33 : vector<32x128xi1> to vector<32x128xi32>
    %35 = arith.addi %24, %34 : vector<32x128xi32>
    %36 = vector.extract_strided_slice %13 {offsets = [0, 2], sizes = [32, 1], strides = [1, 1]} : vector<32x4xi32> to vector<32x1xi32>
    %c0_i32_11 = arith.constant 0 : i32
    %c6_i32 = arith.constant 6 : i32
    %37 = vector.broadcast %c0_i32_11 : i32 to vector<32x1xi32>
    %38 = arith.maxsi %37, %36 : vector<32x1xi32>
    %39 = vector.broadcast %c6_i32 : i32 to vector<32x1xi32>
    %40 = arith.minsi %39, %38 : vector<32x1xi32>
    %c45_i32 = arith.constant 45 : i32
    %41 = vector.broadcast %c45_i32 : i32 to vector<32x1xi32>
    %42 = arith.addi %40, %41 : vector<32x1xi32>
    %43 = vector.broadcast %42 : vector<32x1xi32> to vector<32x128xi32>
    %44 = arith.cmpi eq, %43, %14 : vector<32x128xi32>
    %45 = arith.extui %44 : vector<32x128xi1> to vector<32x128xi32>
    %46 = arith.addi %35, %45 : vector<32x128xi32>
    %47 = vector.extract_strided_slice %13 {offsets = [0, 3], sizes = [32, 1], strides = [1, 1]} : vector<32x4xi32> to vector<32x1xi32>
    %c0_i32_12 = arith.constant 0 : i32
    %c23_i32 = arith.constant 23 : i32
    %48 = vector.broadcast %c0_i32_12 : i32 to vector<32x1xi32>
    %49 = arith.maxsi %48, %47 : vector<32x1xi32>
    %50 = vector.broadcast %c23_i32 : i32 to vector<32x1xi32>
    %51 = arith.minsi %50, %49 : vector<32x1xi32>
    %c52_i32 = arith.constant 52 : i32
    %52 = vector.broadcast %c52_i32 : i32 to vector<32x1xi32>
    %53 = arith.addi %51, %52 : vector<32x1xi32>
    %54 = vector.broadcast %53 : vector<32x1xi32> to vector<32x128xi32>
    %55 = arith.cmpi eq, %54, %14 : vector<32x128xi32>
    %56 = arith.extui %55 : vector<32x128xi1> to vector<32x128xi32>
    %57 = arith.addi %46, %56 : vector<32x128xi32>
    %58 = arith.sitofp %57 : vector<32x128xi32> to vector<32x128xf32>
    %cst_13 = arith.constant dense<0.000000e+00> : vector<32x128xf32>
    %59 = tpu.matmul %58, %11, %cst_13 {dimension_numbers = #tpu.dot_dimension_numbers<[1], [0], [0], [1], [0, 0, 1, 1], [], []>} : vector<32x128xf32>, vector<128x128xf32>, vector<32x128xf32> -> vector<32x128xf32>
    %60 = arith.addf %10, %59 : vector<32x128xf32>
    %61 = vector.shape_cast %60 : vector<32x128xf32> to vector<2x16x128xf32>
    %c0_14 = arith.constant 0 : index
    %c0_15 = arith.constant 0 : index
    %62 = vector.load %arg5[%c0_14, %c0_15] : memref<16x128xf32, #tpu.memory_space<vmem>>, vector<16x128xf32>
    %63 = vector.shape_cast %62 : vector<16x128xf32> to vector<1x16x128xf32>
    %64 = vector.broadcast %63 : vector<1x16x128xf32> to vector<2x16x128xf32>
    %65 = arith.addf %61, %64 : vector<2x16x128xf32>
    %c0_16 = arith.constant 0 : index
    %c0_17 = arith.constant 0 : index
    %c0_18 = arith.constant 0 : index
    %66 = vector.load %arg6[%c0_16, %c0_17, %c0_18] : memref<2x16x128xf32, #tpu.memory_space<vmem>>, vector<2x16x128xf32>
    tpu.vector_store %arg6[%c0_16, %c0_17, %c0_18], %65 {strides = array<i32>} : memref<2x16x128xf32, #tpu.memory_space<vmem>>, vector<2x16x128xf32>,
    return
  }
  func.func @transform_0(%arg0: i32) -> (i32, i32, i32) {
    %c0_i32 = arith.constant 0 : i32
    %c0_i32_0 = arith.constant 0 : i32
    %c0_i32_1 = arith.constant 0 : i32
    return %arg0, %c0_i32, %c0_i32_0 : i32, i32, i32
  }
  func.func @transform_1(%arg0: i32) -> (i32, i32, i32) {
    %c0_i32 = arith.constant 0 : i32
    %c0_i32_0 = arith.constant 0 : i32
    %c0_i32_1 = arith.constant 0 : i32
    return %arg0, %c0_i32, %c0_i32_0 : i32, i32, i32
  }
  func.func @transform_2(%arg0: i32) -> (i32, i32) {
    %c0_i32 = arith.constant 0 : i32
    %c0_i32_0 = arith.constant 0 : i32
    %c0_i32_1 = arith.constant 0 : i32
    return %c0_i32, %c0_i32_0 : i32, i32
  }
  func.func @transform_3(%arg0: i32) -> (i32, i32) {
    %c0_i32 = arith.constant 0 : i32
    %c0_i32_0 = arith.constant 0 : i32
    %c0_i32_1 = arith.constant 0 : i32
    return %c0_i32, %c0_i32_0 : i32, i32
  }
  func.func @transform_4(%arg0: i32) -> (i32, i32) {
    %c0_i32 = arith.constant 0 : i32
    %c0_i32_0 = arith.constant 0 : i32
    %c0_i32_1 = arith.constant 0 : i32
    return %c0_i32, %c0_i32_0 : i32, i32
  }
  func.func @transform_5(%arg0: i32) -> (i32, i32, i32) {
    %c0_i32 = arith.constant 0 : i32
    %c0_i32_0 = arith.constant 0 : i32
    %c0_i32_1 = arith.constant 0 : i32
    return %arg0, %c0_i32, %c0_i32_0 : i32, i32, i32
  }
}

</mosaic_0001>

<llo_original>
// kernel: _lambda_.1
$region0: #{_lambda_.1}
  #allocation0 [shape = 'u32[]', space=smem, size = 0x4, offset = 0x4, fixed_abs, tag = 'smem constant byte address 0x4 - core index']
  #allocation1 [shape = 'u32[144,128]{1,0:T(1,128)}', space=vmem, size = 0x12000, scoped, tag = 'internal scratch']
  %s0 = inlined_call_operand.vmem [shape: f32[2,16,4], index: 0, kind: input, shape index: {}]
  %s1 = inlined_call_operand.vmem [shape: s32[2,16,4], index: 1, kind: input, shape index: {}]
  %s2 = inlined_call_operand.vmem [shape: f32[12,128], index: 2, kind: input, shape index: {}]
  %s3 = inlined_call_operand.hbm [shape: f32[128,128], index: 3, kind: input, shape index: {}]
  %s4 = inlined_call_operand.vmem [shape: f32[64,128], index: 4, kind: input, shape index: {}]
  %s5 = inlined_call_operand.hbm [shape: f32[2,16,128], index: 5, kind: output, shape index: {}]
  %s6 = sld [smem:[#allocation0]]
  $region34: #{_lambda_.1} parent=0
    _
  %s8 = ssub.s32 1, %s6
  %s9 = scalar_select 0, %s8, %s6
  $region1: #{_lambda_.1} parent=0
    #allocation2 [shape = 'u8[65536]{0}', space=vmem, size = 0x10000, scoped, tag = 'input window, operand 3, single buffered']
    #allocation3 [shape = 's32[1]{0}', space=sflag, size = 0x4, scoped, tag = 'scoped memory for _lambda_.1']
    #allocation4 [shape = 's32[1]{0}', space=sflag, size = 0x4, scoped, tag = 'scoped memory for _lambda_.1']
    #allocation5 [shape = 'u8[16384]{0}', space=vmem, size = 0x4000, scoped, tag = 'output window, operand 0, single buffered']
    %10 = vsyncpa [#allocation3], 0
    %11 = vsyncpa [#allocation4], 0
    // Predicated region
    $region2: #{_lambda_.1} parent=1 // pred_check
      _
    $region3: #{_lambda_.1} parent=1 // pred_check_branch
      %13 = sbr.rel (0) target = $region5
    $region4: #{_lambda_.1} parent=1 // pred_region
      _
    $region5: #{_lambda_.1} parent=1 // pred_fallthru
      _
    // Predicated region
    $region6: #{_lambda_.1} parent=1 // pred_check
      _
    $region7: #{_lambda_.1} parent=1 // pred_check_branch
      %15 = sbr.rel (0) target = $region9
    $region8: #{_lambda_.1} parent=1 // pred_region
      _
    $region9: #{_lambda_.1} parent=1 // pred_fallthru
      _
    // Predicated region
    $region10: #{_lambda_.1} parent=1 // pred_check
      _
    $region11: #{_lambda_.1} parent=1 // pred_check_branch
      %17 = sbr.rel (0) target = $region13
    $region12: #{_lambda_.1} parent=1 // pred_region
      _
    $region13: #{_lambda_.1} parent=1 // pred_fallthru
      _
    // Predicated region
    $region14: #{_lambda_.1} parent=1 // pred_check
      _
    $region15: #{_lambda_.1} parent=1 // pred_check_branch
      %19 = sbr.rel (0) target = $region17
    $region16: #{_lambda_.1} parent=1 // pred_region
      %s21 = ssub.s32 2048, 2048
      %22 = vsyncadd [#allocation3], %s21
      %s23 = sshll.u32 [#allocation2], 4
      %s24 = int_to_ptr.vmem [resolvable:$true] %s23
      %29 = dma.hbm_to_vmem [thread:$0]  %s3, 2048, %s24, [#allocation3], 128, 128, 8
    $region17: #{_lambda_.1} parent=1 // pred_fallthru
      _
    // Predicated region
    $region18: #{_lambda_.1} parent=1 // pred_check
      _
    $region19: #{_lambda_.1} parent=1 // pred_check_branch
      %31 = sbr.rel (0) target = $region21
    $region20: #{_lambda_.1} parent=1 // pred_region
      _
    $region21: #{_lambda_.1} parent=1 // pred_fallthru
      _
    // Predicated region
    $region22: #{_lambda_.1} parent=1 // pred_check
      _
    $region23: #{_lambda_.1} parent=1 // pred_check_branch
      %33 = sbr.rel (0) target = $region25
    $region24: #{_lambda_.1} parent=1 // pred_region
      %34 = dma.done [#allocation3], 2048
    $region25: #{_lambda_.1} parent=1 // pred_fallthru
      _
    %v35 = vld [vmem:[%s0] sm:$0xff]
    %v36 = vld [vmem:[%s0 + $0x8] sm:$0xff]
    %v37 = vld [vmem:[%s0 + $0x10] sm:$0xff]
    %v38 = vld [vmem:[%s0 + $0x18] sm:$0xff]
    %v39 = vld [vmem:[%s2] sm:$0xff]
    %v40 = vld [vmem:[%s2 + $0x8] sm:$0xf]
    %v43 = vrot.slane %v36, 7
    %v44 = vrot.slane %v38, 7
    %vm49 = vcmask 1040384
    %v50 = vrot.slane %v35, 7
    %v51 = vsel %vm49, %v50, %v43
    %v52 = vrot.slane %v37, 7
    %v53 = vsel %vm49, %v52, %v44
    %v58 = vsel %vm49, %v43, %v50
    %v59 = vsel %vm49, %v44, %v52
    %vm60 = vcmask 1046528
    %v61 = vrot.slane %v35, 1
    %v62 = vrot.slane %v36, 1
    %v63 = vsel %vm60, %v61, %v62
    %v64 = vrot.slane %v37, 1
    %v65 = vrot.slane %v38, 1
    %v66 = vsel %vm60, %v64, %v65
    %v71 = vsel %vm60, %v62, %v61
    %v72 = vsel %vm60, %v65, %v64
    %73 = vrot.lane.b32.xlu0 %v35, 4
    %v74 = vpop.permute.xlu0 %73
    %75 = vrot.lane.b32.xlu0 %v36, 4
    %v76 = vpop.permute.xlu0 %75
    %77 = vrot.lane.b32.xlu0 %v37, 4
    %v78 = vpop.permute.xlu0 %77
    %79 = vrot.lane.b32.xlu0 %v38, 4
    %v80 = vpop.permute.xlu0 %79
    %87 = vrot.lane.b32.xlu0 %v63, 8
    %v88 = vpop.permute.xlu0 %87
    %89 = vrot.lane.b32.xlu0 %v71, 8
    %v90 = vpop.permute.xlu0 %89
    %91 = vrot.lane.b32.xlu0 %v66, 8
    %v92 = vpop.permute.xlu0 %91
    %93 = vrot.lane.b32.xlu0 %v72, 8
    %v94 = vpop.permute.xlu0 %93
    %vm99 = vcmask 31744
    %v100 = vsel %vm99, %v58, %v74
    %v101 = vsel %vm99, %v51, %v76
    %v102 = vsel %vm99, %v59, %v78
    %v103 = vsel %vm99, %v53, %v80
    %vm104 = vcmask 64512
    %v105 = vsel %vm104, %v100, %v88
    %v106 = vsel %vm104, %v101, %v90
    %v107 = vsel %vm104, %v102, %v92
    %v108 = vsel %vm104, %v103, %v94
    %v109 = vld [vmem:[#allocation2] sm:$0xff]
    %v110 = vld [vmem:[#allocation2 + $0x8] sm:$0xff]
    %v111 = vld [vmem:[#allocation2 + $0x10] sm:$0xff]
    %v112 = vld [vmem:[#allocation2 + $0x18] sm:$0xff]
    %v113 = vld [vmem:[#allocation2 + $0x20] sm:$0xff]
    %v114 = vld [vmem:[#allocation2 + $0x28] sm:$0xff]
    %v115 = vld [vmem:[#allocation2 + $0x30] sm:$0xff]
    %v116 = vld [vmem:[#allocation2 + $0x38] sm:$0xff]
    %v117 = vld [vmem:[#allocation2 + $0x40] sm:$0xff]
    %v118 = vld [vmem:[#allocation2 + $0x48] sm:$0xff]
    %v119 = vld [vmem:[#allocation2 + $0x50] sm:$0xff]
    %v120 = vld [vmem:[#allocation2 + $0x58] sm:$0xff]
    %v121 = vld [vmem:[#allocation2 + $0x60] sm:$0xff]
    %v122 = vld [vmem:[#allocation2 + $0x68] sm:$0xff]
    %v123 = vld [vmem:[#allocation2 + $0x70] sm:$0xff]
    %v124 = vld [vmem:[#allocation2 + $0x78] sm:$0xff]
    %v125 = vld [vmem:[%s1] sm:$0xff]
    %v126 = vld [vmem:[%s1 + $0x8] sm:$0xff]
    %v127 = vld [vmem:[%s1 + $0x10] sm:$0xff]
    %v128 = vld [vmem:[%s1 + $0x18] sm:$0xff]
    %v129 = vlaneseq
    %v130 = vand.u32 %v129, 127
    %vm131 = vcmp.gt.s32.totalorder %v125, 0
    %v132 = vsel %vm131, %v125, 0
    %vm133 = vcmp.gt.s32.totalorder %v126, 0
    %v134 = vsel %vm133, %v126, 0
    %vm135 = vcmp.gt.s32.totalorder %v127, 0
    %v136 = vsel %vm135, %v127, 0
    %vm137 = vcmp.gt.s32.totalorder %v128, 0
    %v138 = vsel %vm137, %v128, 0
    %vm139 = vcmp.lt.s32.totalorder %v132, 12
    %v140 = vsel %vm139, %v132, 12
    %vm141 = vcmp.lt.s32.totalorder %v134, 12
    %v142 = vsel %vm141, %v134, 12
    %vm143 = vcmp.lt.s32.totalorder %v136, 12
    %v144 = vsel %vm143, %v136, 12
    %vm145 = vcmp.lt.s32.totalorder %v138, 12
    %v146 = vsel %vm145, %v138, 12
    %147 = vset.pattern.permute.xlu0 0
    %148 = vperm.xlu0 %147, %v140
    %v149 = vpop.permute.xlu0 %148
    %150 = vset.pattern.permute.xlu0 0
    %151 = vperm.xlu0 %150, %v142
    %v152 = vpop.permute.xlu0 %151
    %153 = vset.pattern.permute.xlu0 0
    %154 = vperm.xlu0 %153, %v144
    %v155 = vpop.permute.xlu0 %154
    %156 = vset.pattern.permute.xlu0 0
    %157 = vperm.xlu0 %156, %v146
    %v158 = vpop.permute.xlu0 %157
    %vm159 = vcmp.eq.s32.totalorder %v149, %v130
    %vm160 = vcmp.eq.s32.totalorder %v152, %v130
    %vm161 = vcmp.eq.s32.totalorder %v155, %v130
    %vm162 = vcmp.eq.s32.totalorder %v158, %v130
    %v163 = vsel %vm159, 1, 0
    %v164 = vsel %vm160, 1, 0
    %v165 = vsel %vm161, 1, 0
    %v166 = vsel %vm162, 1, 0
    %vm167 = vcmp.lt.s32.totalorder %v132, 31
    %v168 = vsel %vm167, %v132, 31
    %vm169 = vcmp.lt.s32.totalorder %v134, 31
    %v170 = vsel %vm169, %v134, 31
    %vm171 = vcmp.lt.s32.totalorder %v136, 31
    %v172 = vsel %vm171, %v136, 31
    %vm173 = vcmp.lt.s32.totalorder %v138, 31
    %v174 = vsel %vm173, %v138, 31
    %v175 = vadd.s32 %v168, 13
    %v176 = vadd.s32 %v170, 13
    %v177 = vadd.s32 %v172, 13
    %v178 = vadd.s32 %v174, 13
    %179 = vset.pattern.permute.xlu0 1
    %180 = vperm.xlu0 %179, %v175
    %v181 = vpop.permute.xlu0 %180
    %182 = vset.pattern.permute.xlu0 1
    %183 = vperm.xlu0 %182, %v176
    %v184 = vpop.permute.xlu0 %183
    %185 = vset.pattern.permute.xlu0 1
    %186 = vperm.xlu0 %185, %v177
    %v187 = vpop.permute.xlu0 %186
    %188 = vset.pattern.permute.xlu0 1
    %189 = vperm.xlu0 %188, %v178
    %v190 = vpop.permute.xlu0 %189
    %vm191 = vcmp.eq.s32.totalorder %v181, %v130
    %vm192 = vcmp.eq.s32.totalorder %v184, %v130
    %vm193 = vcmp.eq.s32.totalorder %v187, %v130
    %vm194 = vcmp.eq.s32.totalorder %v190, %v130
    %v195 = vsel %vm191, 1, 0
    %v196 = vsel %vm192, 1, 0
    %v197 = vsel %vm193, 1, 0
    %v198 = vsel %vm194, 1, 0
    %v199 = vadd.s32 %v163, %v195
    %v200 = vadd.s32 %v164, %v196
    %v201 = vadd.s32 %v165, %v197
    %v202 = vadd.s32 %v166, %v198
    %vm203 = vcmp.lt.s32.totalorder %v132, 6
    %v204 = vsel %vm203, %v132, 6
    %vm205 = vcmp.lt.s32.totalorder %v134, 6
    %v206 = vsel %vm205, %v134, 6
    %vm207 = vcmp.lt.s32.totalorder %v136, 6
    %v208 = vsel %vm207, %v136, 6
    %vm209 = vcmp.lt.s32.totalorder %v138, 6
    %v210 = vsel %vm209, %v138, 6
    %v211 = vadd.s32 %v204, 45
    %v212 = vadd.s32 %v206, 45
    %v213 = vadd.s32 %v208, 45
    %v214 = vadd.s32 %v210, 45
    %215 = vset.pattern.permute.xlu0 2
    %216 = vperm.xlu0 %215, %v211
    %v217 = vpop.permute.xlu0 %216
    %218 = vset.pattern.permute.xlu0 2
    %219 = vperm.xlu0 %218, %v212
    %v220 = vpop.permute.xlu0 %219
    %221 = vset.pattern.permute.xlu0 2
    %222 = vperm.xlu0 %221, %v213
    %v223 = vpop.permute.xlu0 %222
    %224 = vset.pattern.permute.xlu0 2
    %225 = vperm.xlu0 %224, %v214
    %v226 = vpop.permute.xlu0 %225
    %vm227 = vcmp.eq.s32.totalorder %v217, %v130
    %vm228 = vcmp.eq.s32.totalorder %v220, %v130
    %vm229 = vcmp.eq.s32.totalorder %v223, %v130
    %vm230 = vcmp.eq.s32.totalorder %v226, %v130
    %v231 = vsel %vm227, 1, 0
    %v232 = vsel %vm228, 1, 0
    %v233 = vsel %vm229, 1, 0
    %v234 = vsel %vm230, 1, 0
    %v235 = vadd.s32 %v199, %v231
    %v236 = vadd.s32 %v200, %v232
    %v237 = vadd.s32 %v201, %v233
    %v238 = vadd.s32 %v202, %v234
    %vm239 = vcmp.lt.s32.totalorder %v132, 23
    %v240 = vsel %vm239, %v132, 23
    %vm241 = vcmp.lt.s32.totalorder %v134, 23
    %v242 = vsel %vm241, %v134, 23
    %vm243 = vcmp.lt.s32.totalorder %v136, 23
    %v244 = vsel %vm243, %v136, 23
    %vm245 = vcmp.lt.s32.totalorder %v138, 23
    %v246 = vsel %vm245, %v138, 23
    %v247 = vadd.s32 %v240, 52
    %v248 = vadd.s32 %v242, 52
    %v249 = vadd.s32 %v244, 52
    %v250 = vadd.s32 %v246, 52
    %251 = vset.pattern.permute.xlu0 3
    %252 = vperm.xlu0 %251, %v247
    %v253 = vpop.permute.xlu0 %252
    %254 = vset.pattern.permute.xlu0 3
    %255 = vperm.xlu0 %254, %v248
    %v256 = vpop.permute.xlu0 %255
    %257 = vset.pattern.permute.xlu0 3
    %258 = vperm.xlu0 %257, %v249
    %v259 = vpop.permute.xlu0 %258
    %260 = vset.pattern.permute.xlu0 3
    %261 = vperm.xlu0 %260, %v250
    %v262 = vpop.permute.xlu0 %261
    %vm263 = vcmp.eq.s32.totalorder %v253, %v130
    %vm264 = vcmp.eq.s32.totalorder %v256, %v130
    %vm265 = vcmp.eq.s32.totalorder %v259, %v130
    %vm266 = vcmp.eq.s32.totalorder %v262, %v130
    %v267 = vsel %vm263, 1, 0
    %v268 = vsel %vm264, 1, 0
    %v269 = vsel %vm265, 1, 0
    %v270 = vsel %vm266, 1, 0
    %v271 = vadd.s32 %v235, %v267
    %v272 = vadd.s32 %v236, %v268
    %v273 = vadd.s32 %v237, %v269
    %v274 = vadd.s32 %v238, %v270
    %v275 = vcvt.s32.f32 %v271
    %v276 = vcvt.s32.f32 %v272
    %v277 = vcvt.s32.f32 %v273
    %v278 = vcvt.s32.f32 %v274
    %279 = vmatprep.subr.mxu0 0.0
    %280 = vmatpush1.msra.mxu0 %v109
    %281 = vmatprep.subr.mxu0 0.0
    %282 = vmatpush1.msra.mxu0 %v110
    %283 = vmatprep.subr.mxu0 0.0
    %284 = vmatpush1.msra.mxu0 %v111
    %285 = vmatprep.subr.mxu0 0.0
    %286 = vmatpush1.msra.mxu0 %v112
    %287 = vmatprep.subr.mxu0 0.0
    %288 = vmatpush1.msra.mxu0 %v113
    %289 = vmatprep.subr.mxu0 0.0
    %290 = vmatpush1.msra.mxu0 %v114
    %291 = vmatprep.subr.mxu0 0.0
    %292 = vmatpush1.msra.mxu0 %v115
    %293 = vmatprep.subr.mxu0 0.0
    %294 = vmatpush1.msra.mxu0 %v116
    %295 = vmatprep.subr.mxu0 0.0
    %296 = vmatpush1.msra.mxu0 %v117
    %297 = vmatprep.subr.mxu0 0.0
    %298 = vmatpush1.msra.mxu0 %v118
    %299 = vmatprep.subr.mxu0 0.0
    %300 = vmatpush1.msra.mxu0 %v119
    %301 = vmatprep.subr.mxu0 0.0
    %302 = vmatpush1.msra.mxu0 %v120
    %303 = vmatprep.subr.mxu0 0.0
    %304 = vmatpush1.msra.mxu0 %v121
    %305 = vmatprep.subr.mxu0 0.0
    %306 = vmatpush1.msra.mxu0 %v122
    %307 = vmatprep.subr.mxu0 0.0
    %308 = vmatpush1.msra.mxu0 %v123
    %309 = vmatprep.subr.mxu0 0.0
    %310 = vmatpush1.msra.mxu0 %v124
    %311 = vmatprep.subr.mxu0 0.0
    %312 = vmatpush1.msra.mxu0 0.0
    %313 = vmatprep.subr.mxu0 0.0
    %314 = vmatpush1.msra.mxu0 0.0
    %315 = vmatprep.subr.mxu0 0.0
    %316 = vmatpush1.msra.mxu0 0.0
    %317 = vmatprep.subr.mxu0 0.0
    %318 = vmatpush1.msra.mxu0 0.0
    %319 = vmatprep.subr.mxu0 0.0
    %320 = vmatpush1.msra.mxu0 0.0
    %321 = vmatprep.subr.mxu0 0.0
    %322 = vmatpush1.msra.mxu0 0.0
    %323 = vmatprep.subr.mxu0 0.0
    %324 = vmatpush1.msra.mxu0 0.0
    %325 = vmatprep.subr.mxu0 0.0
    %326 = vmatpush1.msra.mxu0 0.0
    %327 = vmatprep.subr.mxu0 0.0
    %328 = vmatpush1.msra.mxu0 0.0
    %329 = vmatprep.subr.mxu0 0.0
    %330 = vmatpush1.msra.mxu0 0.0
    %331 = vmatprep.subr.mxu0 0.0
    %332 = vmatpush1.msra.mxu0 0.0
    %333 = vmatprep.subr.mxu0 0.0
    %334 = vmatpush1.msra.mxu0 0.0
    %335 = vmatprep.subr.mxu0 0.0
    %336 = vmatpush1.msra.mxu0 0.0
    %337 = vmatprep.subr.mxu0 0.0
    %338 = vmatpush1.msra.mxu0 0.0
    %339 = vmatprep.subr.mxu0 0.0
    %340 = vmatpush1.msra.mxu0 0.0
    %341 = vmatprep.subr.mxu0 0.0
    %342 = vmatpush1.msra.mxu0 0.0
    %343 = vmatprep.mubr.f32.mxu0 0.0
    %344 = vmatmul.mubr.f32.gmra.mrb[0].mxu0 %v275
    %v345 = vpop.f32.mrb[0].mxu0
    %v346 = vadd.f32 0.0, %v345
    %v347 = vpop.f32.mrb[0].mxu0
    %348 = vmatprep.mubr.f32.mxu0 0.0
    %349 = vmatmul.mubr.f32.gmra.mrb[0].mxu0 %v276
    %v350 = vpop.f32.mrb[0].mxu0
    %v351 = vadd.f32 0.0, %v350
    %v352 = vpop.f32.mrb[0].mxu0
    %353 = vmatprep.mubr.f32.mxu0 0.0
    %354 = vmatmul.mubr.f32.gmra.mrb[0].mxu0 %v277
    %v355 = vpop.f32.mrb[0].mxu0
    %v356 = vadd.f32 0.0, %v355
    %v357 = vpop.f32.mrb[0].mxu0
    %358 = vmatprep.mubr.f32.mxu0 0.0
    %359 = vmatmul.mubr.f32.gmra.mrb[0].mxu0 %v278
    %v360 = vpop.f32.mrb[0].mxu0
    %v361 = vadd.f32 0.0, %v360
    %v362 = vpop.f32.mrb[0].mxu0
    %363 = vdwg.mxu0
    %vm364 = vcmask 97280
    %v366 = vsel %vm364, %v105, 0
    %v369 = vsel %vm364, %v106, 0
    %v372 = vsel %vm364, %v107, 0
    %v375 = vsel %vm364, %v108, 0
    %vm377 = vcmask 1043456
    %v379 = vsel %vm377, %v40, 0
    %381 = vmatprep.subr.mxu0 0.0
    %382 = vmatpush1.msra.mxu0 %v39
    %383 = vmatprep.subr.mxu0 0.0
    %384 = vmatpush1.msra.mxu0 %v379
    %385 = vmatprep.subr.mxu0 0.0
    %386 = vmatpush1.msra.mxu0 0.0
    %387 = vmatprep.subr.mxu0 0.0
    %388 = vmatpush1.msra.mxu0 0.0
    %389 = vmatprep.subr.mxu0 0.0
    %390 = vmatpush1.msra.mxu0 0.0
    %391 = vmatprep.subr.mxu0 0.0
    %392 = vmatpush1.msra.mxu0 0.0
    %393 = vmatprep.subr.mxu0 0.0
    %394 = vmatpush1.msra.mxu0 0.0
    %395 = vmatprep.subr.mxu0 0.0
    %396 = vmatpush1.msra.mxu0 0.0
    %397 = vmatprep.subr.mxu0 0.0
    %398 = vmatpush1.msra.mxu0 0.0
    %399 = vmatprep.subr.mxu0 0.0
    %400 = vmatpush1.msra.mxu0 0.0
    %401 = vmatprep.subr.mxu0 0.0
    %402 = vmatpush1.msra.mxu0 0.0
    %403 = vmatprep.subr.mxu0 0.0
    %404 = vmatpush1.msra.mxu0 0.0
    %405 = vmatprep.subr.mxu0 0.0
    %406 = vmatpush1.msra.mxu0 0.0
    %407 = vmatprep.subr.mxu0 0.0
    %408 = vmatpush1.msra.mxu0 0.0
    %409 = vmatprep.subr.mxu0 0.0
    %410 = vmatpush1.msra.mxu0 0.0
    %411 = vmatprep.subr.mxu0 0.0
    %412 = vmatpush1.msra.mxu0 0.0
    %413 = vmatprep.subr.mxu0 0.0
    %414 = vmatpush1.msra.mxu0 0.0
    %415 = vmatprep.subr.mxu0 0.0
    %416 = vmatpush1.msra.mxu0 0.0
    %417 = vmatprep.subr.mxu0 0.0
    %418 = vmatpush1.msra.mxu0 0.0
    %419 = vmatprep.subr.mxu0 0.0
    %420 = vmatpush1.msra.mxu0 0.0
    %421 = vmatprep.subr.mxu0 0.0
    %422 = vmatpush1.msra.mxu0 0.0
    %423 = vmatprep.subr.mxu0 0.0
    %424 = vmatpush1.msra.mxu0 0.0
    %425 = vmatprep.subr.mxu0 0.0
    %426 = vmatpush1.msra.mxu0 0.0
    %427 = vmatprep.subr.mxu0 0.0
    %428 = vmatpush1.msra.mxu0 0.0
    %429 = vmatprep.subr.mxu0 0.0
    %430 = vmatpush1.msra.mxu0 0.0
    %431 = vmatprep.subr.mxu0 0.0
    %432 = vmatpush1.msra.mxu0 0.0
    %433 = vmatprep.subr.mxu0 0.0
    %434 = vmatpush1.msra.mxu0 0.0
    %435 = vmatprep.subr.mxu0 0.0
    %436 = vmatpush1.msra.mxu0 0.0
    %437 = vmatprep.subr.mxu0 0.0
    %438 = vmatpush1.msra.mxu0 0.0
    %439 = vmatprep.subr.mxu0 0.0
    %440 = vmatpush1.msra.mxu0 0.0
    %441 = vmatprep.subr.mxu0 0.0
    %442 = vmatpush1.msra.mxu0 0.0
    %443 = vmatprep.subr.mxu0 0.0
    %444 = vmatpush1.msra.mxu0 0.0
    %445 = vmatprep.mubr.f32.mxu0 0.0
    %446 = vmatmul.mubr.f32.gmra.mrb[0].mxu0 %v366
    %v447 = vpop.f32.mrb[0].mxu0
    %v448 = vadd.f32 %v346, %v447
    %v449 = vpop.f32.mrb[0].mxu0
    %450 = vmatprep.mubr.f32.mxu0 0.0
    %451 = vmatmul.mubr.f32.gmra.mrb[0].mxu0 %v369
    %v452 = vpop.f32.mrb[0].mxu0
    %v453 = vadd.f32 %v351, %v452
    %v454 = vpop.f32.mrb[0].mxu0
    %455 = vmatprep.mubr.f32.mxu0 0.0
    %456 = vmatmul.mubr.f32.gmra.mrb[0].mxu0 %v372
    %v457 = vpop.f32.mrb[0].mxu0
    %v458 = vadd.f32 %v356, %v457
    %v459 = vpop.f32.mrb[0].mxu0
    %460 = vmatprep.mubr.f32.mxu0 0.0
    %461 = vmatmul.mubr.f32.gmra.mrb[0].mxu0 %v375
    %v462 = vpop.f32.mrb[0].mxu0
    %v463 = vadd.f32 %v361, %v462
    %v464 = vpop.f32.mrb[0].mxu0
    %465 = vdwg.mxu0
    %v466 = vld [vmem:[%s4] sm:$0xff]
    %v467 = vld [vmem:[%s4 + $0x8] sm:$0xff]
    %v468 = vadd.f32 %v448, %v466
    %v469 = vadd.f32 %v453, %v467
    %v470 = vadd.f32 %v458, %v466
    %v471 = vadd.f32 %v463, %v467
    %472 = vst [vmem:[#allocation5] sm:$0xff] %v468
    %473 = vst [vmem:[#allocation5 + $0x8] sm:$0xff] %v469
    %474 = vst [vmem:[#allocation5 + $0x10] sm:$0xff] %v470
    %475 = vst [vmem:[#allocation5 + $0x18] sm:$0xff] %v471
    // Predicated region
    $region26: #{_lambda_.1} parent=1 // pred_check
      _
    $region27: #{_lambda_.1} parent=1 // pred_check_branch
      %477 = sbr.rel (0) target = $region29
    $region28: #{_lambda_.1} parent=1 // pred_region
      %s479 = ssub.s32 512, 512
      %480 = vsyncadd [#allocation4], %s479
      %s481 = sshll.u32 [#allocation5], 4
      %s482 = int_to_ptr.vmem [resolvable:$true] %s481
      %487 = dma.vmem_to_hbm [thread:$0]  %s482, 512, %s5, [#allocation4], 128, 128, 8
    $region29: #{_lambda_.1} parent=1 // pred_fallthru
      _
    // Predicated region
    $region30: #{_lambda_.1} parent=1 // pred_check
      _
    $region31: #{_lambda_.1} parent=1 // pred_check_branch
      %489 = sbr.rel (0) target = $region33
    $region32: #{_lambda_.1} parent=1 // pred_region
      %490 = dma.done [#allocation4], 512
    $region33: #{_lambda_.1} parent=1 // pred_fallthru
      _
    %491 = vsyncpa [#allocation3], 1
    %492 = vsyncpa [#allocation4], 1

</llo_original>
